<compile_context>
chip_gen: v5e
topology: v5e:2x2
jax: 0.10.0
libtpu: 0.0.40
codegen_flags: <defaults>
</compile_context>

<pallas_src>
import jax
import jax.numpy as jnp
from jax.experimental import pallas as pl
from jax.experimental.pallas import tpu as pltpu

_LANE = 128


def _round_up(a: int, m: int) -> int:
    return (a + m - 1) // m * m


def mlp_kernel(x_ref, w_ref, o_ref):
    # x_ref: (D_IN, TILE_B) f32 — lanes carry batch (lane-dense).
    # w_ref: (D_IN, 1)      f32 — fused weight, VMEM-resident across grid steps.
    # o_ref: (1, TILE_B)    f32 — lane-dense output slab (unmasked stores).
    o_ref[...] = jnp.sum(x_ref[...] * w_ref[...], axis=0, keepdims=True)


def mlp_forward(x, wa, wb, *, max_tile_b=65536):
    """Pallas forward for the PyTorch MLP.

    x : (B, 10) float32
    wa: (10, 10) PyTorch Linear layout (out_features, in_features)
    wb: (1, 10)  PyTorch Linear layout
    Returns (B, 1) float32 == (x @ wa.T) @ wb.T
    """
    B, d_in = x.shape

    # Exact fold: no bias, no activation between the two layers.
    w_fused = wa.T @ wb.T  # (10, 1) f32, computed once at trace time

    # Tile the batch along lanes. Small batches collapse to a single block.
    tile_b = max(_LANE, min(_round_up(max_tile_b, _LANE), _round_up(B, _LANE)))
    b_padded = _round_up(B, tile_b)
    num_tiles = b_padded // tile_b

    # Feature-major (lane-dense) view of x: 10 sublanes x B lanes.
    # TODO(synk): if the caller can supply x already feature-major, this transpose
    # (a tiny separate XLA op here) disappears entirely.
    x_t = x.T  # (10, B)
    if b_padded != B:
        x_t = jnp.pad(x_t, ((0, 0), (0, b_padded - B)))

    out = pl.pallas_call(
        mlp_kernel,
        out_shape=jax.ShapeDtypeStruct((1, b_padded), jnp.float32),
        grid_spec=pl.GridSpec(
            grid=(num_tiles,),
            in_specs=[
                # x tile: (10, TILE_B); first dim equals the full array dim, last dim
                # is a multiple of 128 -> satisfies the (8, 128) constraint.
                pl.BlockSpec((d_in, tile_b), lambda i: (0, i)),
                # Fused weight: full-array block, constant index_map -> VMEM-resident.
                pl.BlockSpec((d_in, 1), lambda i: (0, 0)),
            ],
            # Lane-dense output slab; reshaped to (B, 1) in the wrapper.
            out_specs=pl.BlockSpec((1, tile_b), lambda i: (0, i)),
        ),
        compiler_params=pltpu.CompilerParams(
            dimension_semantics=("parallel",),  # dual-TC sharding on v7x; no-op on v5e/v6e
            vmem_limit_bytes=32 * 1024 * 1024,  # fits double-buffered 64K-row tiles with headroom
        ),
        cost_estimate=pl.CostEstimate(
            flops=2 * B * d_in,
            transcendentals=0,
            bytes_accessed=x.size * 4 + w_fused.size * 4 + b_padded * 4,
        ),
    )(x_t, w_fused)

    return out[0, :B].reshape(B, 1)


if __name__ == "__main__":
    key = jax.random.PRNGKey(0)
    k_x, k_a, k_b = jax.random.split(key, 3)

    B, D_IN, D_HID, D_OUT = 128, 10, 10, 1

    # PyTorch-style init: uniform(-1/sqrt(fan_in), 1/sqrt(fan_in)), layout (out, in).
    bound_a = 1.0 / (D_IN ** 0.5)
    bound_b = 1.0 / (D_HID ** 0.5)
    wa = jax.random.uniform(k_a, (D_HID, D_IN), jnp.float32, -bound_a, bound_a)  # (10, 10)
    wb = jax.random.uniform(k_b, (D_OUT, D_HID), jnp.float32, -bound_b, bound_b)  # (1, 10)
    x = jax.random.normal(k_x, (B, D_IN), jnp.float32)

    out = jax.block_until_ready(mlp_forward(x, wa, wb))
    assert out.shape == (B, D_OUT)

    # Full-f32 module semantics (no bf16 quantization anywhere now).
    ref = (x @ wa.T) @ wb.T
    assert jnp.allclose(out, ref, atol=1e-4, rtol=1e-4)

    # Ragged batch (exercises lane padding instead of a hard assert).
    x2 = jax.random.normal(jax.random.PRNGKey(1), (50, D_IN), jnp.float32)
    out2 = jax.block_until_ready(mlp_forward(x2, wa, wb))
    assert out2.shape == (50, 1)
    assert jnp.allclose(out2, (x2 @ wa.T) @ wb.T, atol=1e-4, rtol=1e-4)

    # Forced multi-tile grid (exercises the pipelined batch tiling + tail padding).
    x3 = jax.random.normal(jax.random.PRNGKey(2), (300, D_IN), jnp.float32)
    out3 = jax.block_until_ready(mlp_forward(x3, wa, wb, max_tile_b=128))
    assert out3.shape == (300, 1)
    assert jnp.allclose(out3, (x3 @ wa.T) @ wb.T, atol=1e-4, rtol=1e-4)

    print("KERNEL_OK")
</pallas_src>

<mosaic_0001>
module attributes {stable_mosaic.version = 11 : i64} {
  func.func @mlp_kernel(%arg0: i32, %arg1: memref<10x128xf32, #tpu.memory_space<vmem>>, %arg2: memref<10x1xf32, #tpu.memory_space<vmem>>, %arg3: memref<1x128xf32, #tpu.memory_space<vmem>>) attributes {dimension_semantics = [#tpu.dimension_semantics<parallel>], iteration_bounds = array<i64: 1>, scalar_prefetch = 0 : i64, scratch_operands = 0 : i64, tpu.core_type = #tpu.core_type<tc>, window_params = [{transform_indices = @transform_0, window_bounds = array<i64: 10, 128>}, {pipeline_mode = #tpu.pipeline_mode<synchronous>, transform_indices = @transform_1, window_bounds = array<i64: 10, 1>}, {transform_indices = @transform_2, window_bounds = array<i64: 1, 128>}]} {
    %c0 = arith.constant 0 : index
    %c0_0 = arith.constant 0 : index
    %0 = vector.load %arg1[%c0, %c0_0] : memref<10x128xf32, #tpu.memory_space<vmem>>, vector<10x128xf32>
    %c0_1 = arith.constant 0 : index
    %c0_2 = arith.constant 0 : index
    %1 = vector.load %arg2[%c0_1, %c0_2] : memref<10x1xf32, #tpu.memory_space<vmem>>, vector<10x1xf32>
    %2 = vector.broadcast %1 : vector<10x1xf32> to vector<10x128xf32>
    %3 = arith.mulf %0, %2 : vector<10x128xf32>
    %cst = arith.constant dense<0.000000e+00> : vector<128xf32>
    %4 = vector.multi_reduction <add>, %3, %cst [0] : vector<10x128xf32> to vector<128xf32>
    %5 = vector.shape_cast %4 : vector<128xf32> to vector<1x128xf32>
    %c0_3 = arith.constant 0 : index
    %c0_4 = arith.constant 0 : index
    %6 = vector.load %arg3[%c0_3, %c0_4] : memref<1x128xf32, #tpu.memory_space<vmem>>, vector<1x128xf32>
    tpu.vector_store %arg3[%c0_3, %c0_4], %5 {strides = array<i32>} : memref<1x128xf32, #tpu.memory_space<vmem>>, vector<1x128xf32>,
    return
  }
  func.func @transform_0(%arg0: i32) -> (i32, i32) {
    %c0_i32 = arith.constant 0 : i32
    %c0_i32_0 = arith.constant 0 : i32
    return %c0_i32, %arg0 : i32, i32
  }
  func.func @transform_1(%arg0: i32) -> (i32, i32) {
    %c0_i32 = arith.constant 0 : i32
    %c0_i32_0 = arith.constant 0 : i32
    %c0_i32_1 = arith.constant 0 : i32
    return %c0_i32, %c0_i32_0 : i32, i32
  }
  func.func @transform_2(%arg0: i32) -> (i32, i32) {
    %c0_i32 = arith.constant 0 : i32
    %c0_i32_0 = arith.constant 0 : i32
    return %c0_i32, %arg0 : i32, i32
  }
}

</mosaic_0001>

<llo_original>
// kernel: tpu_custom_call.1
$region0: #{tpu_custom_call.1}
  #allocation0 [shape = 'u32[]', space=smem, size = 0x4, offset = 0x4, fixed_abs, tag = 'smem constant byte address 0x4 - core index']
  #allocation1 [shape = 'u32[72,128]{1,0:T(1,128)}', space=vmem, size = 0x9000, scoped, tag = 'internal scratch']
  %s0 = inlined_call_operand.vmem [shape: f32[10,128], index: 0, kind: input, shape index: {}]
  %s1 = inlined_call_operand.vmem [shape: f32[10,1], index: 1, kind: input, shape index: {}]
  %s2 = inlined_call_operand.hbm [shape: f32[1,128], index: 2, kind: output, shape index: {}]
  %s3 = sld [smem:[#allocation0]]
  $region18: #{tpu_custom_call.1} parent=0
    _
  %s5 = ssub.s32 1, %s3
  %s6 = scalar_select 0, %s5, %s3
  $region1: #{tpu_custom_call.1} parent=0
    #allocation2 [shape = 'u8[512]{0}', space=vmem, size = 0x400, scoped, tag = 'output window, operand 0, single buffered']
    #allocation3 [shape = 's32[1]{0}', space=sflag, size = 0x4, scoped, tag = 'scoped memory for tpu_custom_call.1']
    %7 = vsyncpa [#allocation3], 0
    // Predicated region
    $region2: #{tpu_custom_call.1} parent=1 // pred_check
      _
    $region3: #{tpu_custom_call.1} parent=1 // pred_check_branch
      %9 = sbr.rel (0) target = $region5
    $region4: #{tpu_custom_call.1} parent=1 // pred_region
      _
    $region5: #{tpu_custom_call.1} parent=1 // pred_fallthru
      _
    // Predicated region
    $region6: #{tpu_custom_call.1} parent=1 // pred_check
      _
    $region7: #{tpu_custom_call.1} parent=1 // pred_check_branch
      %11 = sbr.rel (0) target = $region9
    $region8: #{tpu_custom_call.1} parent=1 // pred_region
      _
    $region9: #{tpu_custom_call.1} parent=1 // pred_fallthru
      _
    %v12 = vld [vmem:[%s0] sm:$0xff]
    %v13 = vld [vmem:[%s0 + $0x8] sm:$0x3]
    %v14 = vld [vmem:[%s1] sm:$0xff]
    %v15 = vld [vmem:[%s1 + $0x8] sm:$0x3]
    %17 = vset.pattern.permute.xlu0 0
    %18 = vperm.xlu0 %17, %v14
    %v19 = vpop.permute.xlu0 %18
    %22 = vset.pattern.permute.xlu0 0
    %23 = vperm.xlu0 %22, %v15
    %v24 = vpop.permute.xlu0 %23
    %v26 = vmul.f32 %v12, %v19
    %v27 = vmul.f32 %v13, %v24
    %vm28 = vcmask 1041408
    %v29 = vsel %vm28, %v27, 0.0
    %v30 = vadd.f32 %v26, %v29
    %v31 = vrot.slane %v30, 4
    %v32 = vadd.f32 %v30, %v31
    %v33 = vrot.slane %v32, 2
    %v34 = vadd.f32 %v32, %v33
    %v35 = vrot.slane %v34, 1
    %v36 = vadd.f32 %v34, %v35
    %37 = vst [vmem:[#allocation2] sm:$0x1] %v36
    // Predicated region
    $region10: #{tpu_custom_call.1} parent=1 // pred_check
      _
    $region11: #{tpu_custom_call.1} parent=1 // pred_check_branch
      %39 = sbr.rel (0) target = $region13
    $region12: #{tpu_custom_call.1} parent=1 // pred_region
      %41 = vsyncadd [#allocation3], 0
      %s43 = sshll.u32 [#allocation2], 4
      %s44 = int_to_ptr.vmem [resolvable:$true] %s43
      %s45 = sshll.u32 %s2, 4
      %s46 = int_to_ptr.hbm [resolvable:$true] %s45
      %48 = dma.vmem_to_hbm [thread:$0]  %s44, 16, %s46, [#allocation3]
    $region13: #{tpu_custom_call.1} parent=1 // pred_fallthru
      _
    // Predicated region
    $region14: #{tpu_custom_call.1} parent=1 // pred_check
      _
    $region15: #{tpu_custom_call.1} parent=1 // pred_check_branch
      %50 = sbr.rel (0) target = $region17
    $region16: #{tpu_custom_call.1} parent=1 // pred_region
      %52 = dma.done [#allocation3], 16
    $region17: #{tpu_custom_call.1} parent=1 // pred_fallthru
      _
    %53 = vsyncpa [#allocation3], 1

</llo_original>
